<compile_context>
chip_gen: v5e
topology: v5e:2x2
jax: 0.10.0
libtpu: 0.0.40
codegen_flags: <defaults>
</compile_context>

<pallas_src>
import functools

import jax
import jax.numpy as jnp
from jax.experimental import pallas as pl
from jax.experimental.pallas import tpu as pltpu


def _round_up(x, m):
    return ((x + m - 1) // m) * m


def _vmem_capacity_bytes(default=64 * 1024 * 1024):
    """Physical per-core VMEM bytes; conservative 64 MiB (v7x) fallback."""
    try:
        cap = getattr(pltpu.get_tpu_info(), "vmem_capacity_bytes", None)
        if cap:
            return int(cap)
    except Exception:
        pass
    return default


def _focal_loss_kernel(inputs_ref, targets_ref, alpha_ref, out_ref, acc_ref, *,
                       gamma, size_average, n_valid, tile_rows,
                       tiles_per_core, first_maskable, needs_mask):
    i = pl.program_id(0)                      # core split   (parallel)
    j = pl.program_id(1)                      # batch tile   (serial reduction)
    tile_idx = i * tiles_per_core + j         # logical (unclamped) batch tile

    @pl.when(j == 0)
    def _():
        acc_ref[...] = jnp.zeros_like(acc_ref)

    x = inputs_ref[...].astype(jnp.float32)   # (TN, C) logits
    t = targets_ref[...]                      # (TN, 1) int32 class ids
    a = alpha_ref[...].astype(jnp.float32)    # (1, C)  per-class alpha

    # Target-class log-softmax in log-sum-exp form (no full (TN, C) divide).
    m = jnp.max(x, axis=1, keepdims=True)                     # (TN, 1)
    s = jnp.sum(jnp.exp(x - m), axis=1, keepdims=True)        # (TN, 1)

    col = jax.lax.broadcasted_iota(jnp.int32, x.shape, 1)     # (TN, C)
    class_mask = (col == t).astype(jnp.float32)               # one-hot
    x_t = jnp.sum(x * class_mask, axis=1, keepdims=True)      # logit at target
    alpha_t = jnp.sum(a * class_mask, axis=1, keepdims=True)  # alpha[target]

    log_p = (x_t - m) - jnp.log(s)            # (TN, 1) log softmax[target]
    probs = jnp.exp(log_p)                    # (TN, 1) softmax[target] (EUP)

    one_minus_p = 1.0 - probs
    if float(gamma) == int(gamma) and int(gamma) >= 0:
        w = jnp.ones_like(one_minus_p)
        for _ in range(int(gamma)):           # repeated VPU multiply
            w = w * one_minus_p
    else:
        w = jnp.power(one_minus_p, gamma)

    batch_loss = -alpha_t * w * log_p         # (TN, 1)

    if needs_mask:
        # Only tiles >= first_maskable can contain invalid rows (partial last
        # tile of real data, or a clamped out-of-range padding tile).
        @pl.when(tile_idx >= first_maskable)
        def _():
            row = (jax.lax.broadcasted_iota(jnp.int32, (tile_rows, 1), 0)
                   + tile_idx * tile_rows)
            masked = jnp.where(row < n_valid, batch_loss, 0.0)   # select, not *
            acc_ref[...] += jnp.sum(masked, axis=0, keepdims=True)

        @pl.when(tile_idx < first_maskable)
        def _():
            acc_ref[...] += jnp.sum(batch_loss, axis=0, keepdims=True)
    else:
        acc_ref[...] += jnp.sum(batch_loss, axis=0, keepdims=True)

    @pl.when(j == pl.num_programs(1) - 1)
    def _():
        total = acc_ref[...]
        if size_average:
            total = total * jnp.float32(1.0 / float(n_valid))  # hoisted 1/N
        out_ref[...] = jnp.broadcast_to(total, out_ref.shape)  # lane-dense block


def focal_loss(inputs, targets, alpha, gamma=2.0, size_average=True,
               num_cores=2, target_block_bytes=2 << 20, tile_rows=None):
    """inputs: (N, C) logits (any float dtype); targets: (N,) int; alpha: (C,)."""
    N, C = inputs.shape
    targets2d = targets.reshape(N, 1).astype(jnp.int32)
    alpha2d = alpha.reshape(1, C).astype(jnp.float32)

    itemsize = jnp.dtype(inputs.dtype).itemsize
    sub = {4: 8, 2: 16, 1: 32}.get(itemsize, 8)   # sublane packing per dtype

    # ---- per-generation VMEM-aware tile sizing -----------------------------
    vmem_cap = _vmem_capacity_bytes()
    budget = int(vmem_cap * 0.35)                 # blocks + temporaries budget

    lanes = 128
    logits_row_vmem = _round_up(C, lanes) * itemsize   # lane-padded footprint
    f32_row_vmem = _round_up(C, lanes) * 4
    targets_row_vmem = lanes * 4
    # 2x double-buffered inputs + ~6 full-block f32 temporaries for the chain.
    row_cost = 2 * (logits_row_vmem + targets_row_vmem) + 6 * f32_row_vmem
    max_tn = max(sub, (budget // row_cost) // sub * sub)

    if tile_rows is not None:
        tn = _round_up(int(tile_rows), sub)
    else:
        # Target ~2 MiB of DMA'd logits per block (per-step overhead amortized).
        tn = _round_up(max(1, target_block_bytes // max(1, C * itemsize)), sub)
    tn = min(tn, max_tn)
    if N <= sub:
        tn = N                                    # whole array is one block
    else:
        tn = max(sub, min(tn, (N // sub) * sub))  # keep block start in-bounds

    total_tiles = -(-N // tn)
    num_cores = max(1, min(int(num_cores), total_tiles))
    tiles_per_core = -(-total_tiles // num_cores)
    grid = (num_cores, tiles_per_core)
    last_tile = total_tiles - 1

    first_maskable = total_tiles - 1 if (N % tn) else total_tiles
    needs_mask = (num_cores * tiles_per_core) > first_maskable

    def tile_map(i, j):
        # Clamp out-of-range logical tiles to the last real tile; their rows
        # are masked out in-kernel via the row < N select.
        return (jnp.minimum(i * tiles_per_core + j, last_tile), 0)

    kernel = functools.partial(
        _focal_loss_kernel, gamma=gamma, size_average=size_average,
        n_valid=N, tile_rows=tn, tiles_per_core=tiles_per_core,
        first_maskable=first_maskable, needs_mask=needs_mask)

    cost = pl.CostEstimate(
        flops=int(8 * N * C + 16 * N),
        transcendentals=int(N * C + 2 * N),
        bytes_accessed=int(N * C * itemsize + N * 4 + C * 4
                           + num_cores * 8 * 128 * 4),
    )

    out = pl.pallas_call(
        kernel,
        out_shape=jax.ShapeDtypeStruct((num_cores * 8, 128), jnp.float32),
        grid=grid,
        in_specs=[
            pl.BlockSpec((tn, C), tile_map),            # logits tile
            pl.BlockSpec((tn, 1), tile_map),            # targets tile
            pl.BlockSpec((1, C), lambda i, j: (0, 0)),  # alpha (resident)
        ],
        out_specs=pl.BlockSpec((8, 128), lambda i, j: (i, 0)),  # per-core block
        scratch_shapes=[pltpu.VMEM((1, 1), jnp.float32)],
        compiler_params=pltpu.CompilerParams(
            dimension_semantics=("parallel", "arbitrary"),
            vmem_limit_bytes=int(vmem_cap * 0.7)),
        cost_estimate=cost,
    )(inputs, targets2d, alpha2d)

    # Sum the per-core partials (each already scaled by 1/N if size_average).
    return jnp.sum(out[0::8, 0])


def focal_loss_ref(inputs, targets, alpha, gamma=2.0, size_average=True):
    """Pure-JAX reference mirroring the PyTorch forward."""
    p = jax.nn.softmax(inputs.astype(jnp.float32), axis=1)
    mask = jax.nn.one_hot(targets, inputs.shape[1], dtype=jnp.float32)
    probs = jnp.sum(p * mask, axis=1, keepdims=True)
    a = alpha[targets].reshape(-1, 1)
    batch_loss = -a * (1.0 - probs) ** gamma * jnp.log(probs)
    return jnp.mean(batch_loss) if size_average else jnp.sum(batch_loss)


if __name__ == "__main__":
    class_num = 16
    gamma = 2.0
    key = jax.random.PRNGKey(0)

    # Case 1: module-sized example (single tile, single core).
    N = 8
    k1, k2 = jax.random.split(key)
    inputs = jax.random.normal(k1, (N, class_num), dtype=jnp.float32)
    targets = jax.random.randint(k2, (N,), 0, class_num, dtype=jnp.int32)
    alpha = jnp.ones((class_num,), dtype=jnp.float32)   # FocalLoss(alpha=None)

    loss = focal_loss(inputs, targets, alpha, gamma=gamma, size_average=True)
    jax.block_until_ready(loss)
    ref = focal_loss_ref(inputs, targets, alpha, gamma=gamma, size_average=True)
    assert jnp.allclose(loss, ref, rtol=1e-5, atol=1e-6), (loss, ref)

    # Case 2: multi-tile, two-"core" grid with a partial last tile and a
    # clamped+masked padding tile (exercises accumulator init/finalize, the
    # pl.when-guarded row mask and the per-core partial outputs), plus
    # size_average=False.
    N2 = 20
    k3, k4 = jax.random.split(k1)
    inputs2 = jax.random.normal(k3, (N2, class_num), dtype=jnp.float32)
    targets2 = jax.random.randint(k4, (N2,), 0, class_num, dtype=jnp.int32)

    loss2 = focal_loss(inputs2, targets2, alpha, gamma=gamma,
                       size_average=True, tile_rows=8, num_cores=2)
    loss3 = focal_loss(inputs2, targets2, alpha, gamma=gamma,
                       size_average=False, tile_rows=8, num_cores=2)
    jax.block_until_ready((loss2, loss3))
    ref2 = focal_loss_ref(inputs2, targets2, alpha, gamma=gamma, size_average=True)
    ref3 = focal_loss_ref(inputs2, targets2, alpha, gamma=gamma, size_average=False)
    assert jnp.allclose(loss2, ref2, rtol=1e-5, atol=1e-6), (loss2, ref2)
    assert jnp.allclose(loss3, ref3, rtol=1e-5, atol=1e-6), (loss3, ref3)

    print("KERNEL_OK")
</pallas_src>

<mosaic_0001>
module attributes {stable_mosaic.version = 11 : i64} {
  func.func @_focal_loss_kernel(%arg0: i32, %arg1: i32, %arg2: memref<8x16xf32, #tpu.memory_space<vmem>>, %arg3: memref<8x1xi32, #tpu.memory_space<vmem>>, %arg4: memref<1x16xf32, #tpu.memory_space<vmem>>, %arg5: memref<8x128xf32, #tpu.memory_space<vmem>>, %arg6: memref<1x1xf32, #tpu.memory_space<vmem>>) attributes {dimension_semantics = [#tpu.dimension_semantics<parallel>, #tpu.dimension_semantics<arbitrary>], iteration_bounds = array<i64: 1, 1>, scalar_prefetch = 0 : i64, scratch_operands = 1 : i64, tpu.core_type = #tpu.core_type<tc>, window_params = [{transform_indices = @transform_0, window_bounds = array<i64: 8, 16>}, {transform_indices = @transform_1, window_bounds = array<i64: 8, 1>}, {pipeline_mode = #tpu.pipeline_mode<synchronous>, transform_indices = @transform_2, window_bounds = array<i64: 1, 16>}, {transform_indices = @transform_3, window_bounds = array<i64: 8, 128>}]} {
    %c0_i32 = arith.constant 0 : i32
    %0 = arith.cmpi eq, %arg1, %c0_i32 : i32
    %1 = arith.extui %0 : i1 to i32
    %c0_i32_0 = arith.constant 0 : i32
    %2 = arith.cmpi ne, %1, %c0_i32_0 : i32
    scf.if %2 {
      %cst_19 = arith.constant 0.000000e+00 : f32
      %46 = vector.broadcast %cst_19 : f32 to vector<1x1xf32>
      %c0_20 = arith.constant 0 : index
      %c0_21 = arith.constant 0 : index
      %47 = vector.load %arg6[%c0_20, %c0_21] : memref<1x1xf32, #tpu.memory_space<vmem>>, vector<1x1xf32>
      tpu.vector_store %arg6[%c0_20, %c0_21], %46 {strides = array<i32>} : memref<1x1xf32, #tpu.memory_space<vmem>>, vector<1x1xf32>,
    } else {
    }
    %c0 = arith.constant 0 : index
    %c0_1 = arith.constant 0 : index
    %3 = vector.load %arg2[%c0, %c0_1] : memref<8x16xf32, #tpu.memory_space<vmem>>, vector<8x16xf32>
    %c0_2 = arith.constant 0 : index
    %c0_3 = arith.constant 0 : index
    %4 = vector.load %arg3[%c0_2, %c0_3] : memref<8x1xi32, #tpu.memory_space<vmem>>, vector<8x1xi32>
    %c0_4 = arith.constant 0 : index
    %c0_5 = arith.constant 0 : index
    %5 = vector.load %arg4[%c0_4, %c0_5] : memref<1x16xf32, #tpu.memory_space<vmem>>, vector<1x16xf32>
    %cst = arith.constant dense<0xFF800000> : vector<8xf32>
    %6 = vector.multi_reduction <maximumf>, %3, %cst [1] : vector<8x16xf32> to vector<8xf32>
    %7 = vector.shape_cast %6 : vector<8xf32> to vector<8x1xf32>
    %8 = vector.broadcast %7 : vector<8x1xf32> to vector<8x16xf32>
    %9 = arith.subf %3, %8 : vector<8x16xf32>
    %10 = math.exp %9 : vector<8x16xf32>
    %cst_6 = arith.constant dense<0.000000e+00> : vector<8xf32>
    %11 = vector.multi_reduction <add>, %10, %cst_6 [1] : vector<8x16xf32> to vector<8xf32>
    %12 = vector.shape_cast %11 : vector<8xf32> to vector<8x1xf32>
    %13 = tpu.iota {dimensions = array<i32: 1>} : vector<8x16xi32>
    %14 = vector.broadcast %4 : vector<8x1xi32> to vector<8x16xi32>
    %15 = arith.cmpi eq, %13, %14 : vector<8x16xi32>
    %16 = arith.extui %15 : vector<8x16xi1> to vector<8x16xi32>
    %17 = arith.sitofp %16 : vector<8x16xi32> to vector<8x16xf32>
    %18 = arith.mulf %3, %17 : vector<8x16xf32>
    %cst_7 = arith.constant dense<0.000000e+00> : vector<8xf32>
    %19 = vector.multi_reduction <add>, %18, %cst_7 [1] : vector<8x16xf32> to vector<8xf32>
    %20 = vector.shape_cast %19 : vector<8xf32> to vector<8x1xf32>
    %21 = vector.broadcast %5 : vector<1x16xf32> to vector<8x16xf32>
    %22 = arith.mulf %21, %17 : vector<8x16xf32>
    %cst_8 = arith.constant dense<0.000000e+00> : vector<8xf32>
    %23 = vector.multi_reduction <add>, %22, %cst_8 [1] : vector<8x16xf32> to vector<8xf32>
    %24 = vector.shape_cast %23 : vector<8xf32> to vector<8x1xf32>
    %25 = arith.subf %20, %7 : vector<8x1xf32>
    %26 = math.log %12 : vector<8x1xf32>
    %27 = arith.subf %25, %26 : vector<8x1xf32>
    %28 = math.exp %27 : vector<8x1xf32>
    %cst_9 = arith.constant 1.000000e+00 : f32
    %29 = vector.broadcast %cst_9 : f32 to vector<8x1xf32>
    %30 = arith.subf %29, %28 : vector<8x1xf32>
    %cst_10 = arith.constant 1.000000e+00 : f32
    %31 = vector.broadcast %cst_10 : f32 to vector<8x1xf32>
    %32 = arith.mulf %31, %30 : vector<8x1xf32>
    %33 = arith.mulf %32, %30 : vector<8x1xf32>
    %cst_11 = arith.constant 0.000000e+00 : f32
    %34 = vector.broadcast %cst_11 : f32 to vector<8x1xf32>
    %35 = arith.subf %34, %24 : vector<8x1xf32>
    %36 = arith.mulf %35, %33 : vector<8x1xf32>
    %37 = arith.mulf %36, %27 : vector<8x1xf32>
    %c0_12 = arith.constant 0 : index
    %c0_13 = arith.constant 0 : index
    %38 = vector.load %arg6[%c0_12, %c0_13] : memref<1x1xf32, #tpu.memory_space<vmem>>, vector<1x1xf32>
    %cst_14 = arith.constant dense<0.000000e+00> : vector<1xf32>
    %39 = vector.multi_reduction <add>, %37, %cst_14 [0] : vector<8x1xf32> to vector<1xf32>
    %40 = vector.shape_cast %39 : vector<1xf32> to vector<1x1xf32>
    %41 = arith.addf %38, %40 : vector<1x1xf32>
    %c0_15 = arith.constant 0 : index
    %c0_16 = arith.constant 0 : index
    %42 = vector.load %arg6[%c0_15, %c0_16] : memref<1x1xf32, #tpu.memory_space<vmem>>, vector<1x1xf32>
    tpu.vector_store %arg6[%c0_15, %c0_16], %41 {strides = array<i32>} : memref<1x1xf32, #tpu.memory_space<vmem>>, vector<1x1xf32>,
    %c0_i32_17 = arith.constant 0 : i32
    %43 = arith.cmpi eq, %arg1, %c0_i32_17 : i32
    %44 = arith.extui %43 : i1 to i32
    %c0_i32_18 = arith.constant 0 : i32
    %45 = arith.cmpi ne, %44, %c0_i32_18 : i32
    scf.if %45 {
      %c0_19 = arith.constant 0 : index
      %c0_20 = arith.constant 0 : index
      %46 = vector.load %arg6[%c0_19, %c0_20] : memref<1x1xf32, #tpu.memory_space<vmem>>, vector<1x1xf32>
      %cst_21 = arith.constant 1.250000e-01 : f32
      %47 = vector.broadcast %cst_21 : f32 to vector<1x1xf32>
      %48 = arith.mulf %46, %47 : vector<1x1xf32>
      %49 = vector.shape_cast %48 : vector<1x1xf32> to vector<1x1xf32>
      %50 = vector.broadcast %49 : vector<1x1xf32> to vector<8x128xf32>
      %c0_22 = arith.constant 0 : index
      %c0_23 = arith.constant 0 : index
      %51 = vector.load %arg5[%c0_22, %c0_23] : memref<8x128xf32, #tpu.memory_space<vmem>>, vector<8x128xf32>
      tpu.vector_store %arg5[%c0_22, %c0_23], %50 {strides = array<i32>} : memref<8x128xf32, #tpu.memory_space<vmem>>, vector<8x128xf32>,
    } else {
    }
    return
  }
  func.func @transform_0(%arg0: i32, %arg1: i32) -> (i32, i32) {
    %c1_i32 = arith.constant 1 : i32
    %0 = arith.muli %arg0, %c1_i32 : i32
    %1 = arith.addi %0, %arg1 : i32
    %c0_i32 = arith.constant 0 : i32
    %2 = arith.minsi %1, %c0_i32 : i32
    %c0_i32_0 = arith.constant 0 : i32
    %c0_i32_1 = arith.constant 0 : i32
    return %2, %c0_i32_0 : i32, i32
  }
  func.func @transform_1(%arg0: i32, %arg1: i32) -> (i32, i32) {
    %c1_i32 = arith.constant 1 : i32
    %0 = arith.muli %arg0, %c1_i32 : i32
    %1 = arith.addi %0, %arg1 : i32
    %c0_i32 = arith.constant 0 : i32
    %2 = arith.minsi %1, %c0_i32 : i32
    %c0_i32_0 = arith.constant 0 : i32
    %c0_i32_1 = arith.constant 0 : i32
    return %2, %c0_i32_0 : i32, i32
  }
  func.func @transform_2(%arg0: i32, %arg1: i32) -> (i32, i32) {
    %c0_i32 = arith.constant 0 : i32
    %c0_i32_0 = arith.constant 0 : i32
    %c0_i32_1 = arith.constant 0 : i32
    return %c0_i32, %c0_i32_0 : i32, i32
  }
  func.func @transform_3(%arg0: i32, %arg1: i32) -> (i32, i32) {
    %c0_i32 = arith.constant 0 : i32
    %c0_i32_0 = arith.constant 0 : i32
    return %arg0, %c0_i32 : i32, i32
  }
}

</mosaic_0001>

<llo_original>
// kernel: tpu_custom_call.1
$region0: #{tpu_custom_call.1}
  #allocation0 [shape = 'u32[]', space=smem, size = 0x4, offset = 0x4, fixed_abs, tag = 'smem constant byte address 0x4 - core index']
  #allocation1 [shape = 'u32[72,128]{1,0:T(1,128)}', space=vmem, size = 0x9000, scoped, tag = 'internal scratch']
  #allocation2 [shape = 'f32[1,1]{1,0:T(1,128)}', space=vmem, size = 0x200, scoped, tag = 'scratch operand']
  %s0 = inlined_call_operand.vmem [shape: f32[8,16], index: 0, kind: input, shape index: {}]
  %s1 = inlined_call_operand.vmem [shape: s32[8,1], index: 1, kind: input, shape index: {}]
  %s2 = inlined_call_operand.vmem [shape: f32[1,16], index: 2, kind: input, shape index: {}]
  %s3 = inlined_call_operand.hbm [shape: f32[8,128], index: 3, kind: output, shape index: {}]
  %s4 = sld [smem:[#allocation0]]
  $region30: #{tpu_custom_call.1} parent=0
    _
  %s6 = ssub.s32 1, %s4
  %s7 = scalar_select 0, %s6, %s4
  $region1: #{tpu_custom_call.1} parent=0
    #allocation3 [shape = 'u8[4096]{0}', space=vmem, size = 0x1000, scoped, tag = 'output window, operand 0, single buffered']
    #allocation4 [shape = 's32[1]{0}', space=sflag, size = 0x4, scoped, tag = 'scoped memory for tpu_custom_call.1']
    %8 = vsyncpa [#allocation4], 0
    // Predicated region
    $region2: #{tpu_custom_call.1} parent=1 // pred_check
      _
    $region3: #{tpu_custom_call.1} parent=1 // pred_check_branch
      %10 = sbr.rel (0) target = $region5
    $region4: #{tpu_custom_call.1} parent=1 // pred_region
      %s11 = sadd.s32 0, 0
      %p12 = scmp.lt.s32.totalorder %s11, 0
      %s13 = scalar_select %p12, %s11, 0
      %p14 = scmp.lt.s32.totalorder %s13, 0
      %s15 = scalar_select %p14, %s13, 0
      %s16 = smul.addr %s15, 8
      %s17 = scalar_lea.vmem %s0, %s16
      %s18 = sadd.s32 0, 0
      %p19 = scmp.lt.s32.totalorder %s18, 0
      %s20 = scalar_select %p19, %s18, 0
    $region5: #{tpu_custom_call.1} parent=1 // pred_fallthru
      _
    // Predicated region
    $region6: #{tpu_custom_call.1} parent=1 // pred_check
      _
    $region7: #{tpu_custom_call.1} parent=1 // pred_check_branch
      %22 = sbr.rel (0) target = $region9
    $region8: #{tpu_custom_call.1} parent=1 // pred_region
      %s23 = sadd.s32 0, 0
      %p24 = scmp.lt.s32.totalorder %s23, 0
      %s25 = scalar_select %p24, %s23, 0
      %p26 = scmp.lt.s32.totalorder %s25, 0
      %s27 = scalar_select %p26, %s25, 0
      %s28 = smul.addr %s27, 8
      %s29 = scalar_lea.vmem %s1, %s28
      %s30 = sadd.s32 0, 0
      %p31 = scmp.lt.s32.totalorder %s30, 0
      %s32 = scalar_select %p31, %s30, 0
    $region9: #{tpu_custom_call.1} parent=1 // pred_fallthru
      _
    // Predicated region
    $region10: #{tpu_custom_call.1} parent=1 // pred_check
      _
    $region11: #{tpu_custom_call.1} parent=1 // pred_check_branch
      %34 = sbr.rel (0) target = $region13
    $region12: #{tpu_custom_call.1} parent=1 // pred_region
      _
    $region13: #{tpu_custom_call.1} parent=1 // pred_fallthru
      _
    %s35 = sadd.s32 0, 0
    %p36 = scmp.lt.s32.totalorder %s35, 0
    %s37 = scalar_select %p36, %s35, 0
    %p38 = scmp.lt.s32.totalorder %s37, 0
    %s39 = scalar_select %p38, %s37, 0
    %s40 = smul.addr %s39, 8
    %s41 = scalar_lea.vmem %s0, %s40
    %s42 = sadd.s32 0, 0
    %p43 = scmp.lt.s32.totalorder %s42, 0
    %s44 = scalar_select %p43, %s42, 0
    %p45 = scmp.lt.s32.totalorder %s44, 0
    %s46 = scalar_select %p45, %s44, 0
    %s47 = smul.addr %s46, 8
    %s48 = scalar_lea.vmem %s1, %s47
    %s49 = sadd.s32 0, 0
    %p50 = scmp.lt.s32.totalorder %s49, 0
    %s51 = scalar_select %p50, %s49, 0
    %p52 = scmp.lt.s32.totalorder %s51, 0
    %s53 = scalar_select %p52, %s51, 0
    %s54 = smul.addr %s53, 8
    %s55 = scalar_lea.vmem %s0, %s54
    %s56 = sadd.s32 0, 0
    %p57 = scmp.lt.s32.totalorder %s56, 0
    %s58 = scalar_select %p57, %s56, 0
    %s59 = sadd.s32 0, 0
    %p60 = scmp.lt.s32.totalorder %s59, 0
    %s61 = scalar_select %p60, %s59, 0
    %p62 = scmp.lt.s32.totalorder %s61, 0
    %s63 = scalar_select %p62, %s61, 0
    %s64 = smul.addr %s63, 8
    %s65 = scalar_lea.vmem %s1, %s64
    %s66 = sadd.s32 0, 0
    %p67 = scmp.lt.s32.totalorder %s66, 0
    %s68 = scalar_select %p67, %s66, 0
    %p69 = scmp.eq.s32.totalorder 0, 0
    // Predicated region
    $region14: #{tpu_custom_call.1} parent=1 // pred_check
      %p70 = pneg %p69
    $region15: #{tpu_custom_call.1} parent=1 // pred_check_branch
      %72 = sbr.rel (%p70) target = $region17
    $region16: #{tpu_custom_call.1} parent=1 // pred_region
      %vm73 = vcmask 0
      %74 = vst.msk [vmem:[#allocation2] sm:$0x1] %vm73, 0.0
    $region17: #{tpu_custom_call.1} parent=1 // pred_fallthru
      _
    %v75 = vld [vmem:[%s55] sm:$0xff]
    %v76 = vld [vmem:[%s65] sm:$0xff]
    %v77 = vld [vmem:[%s2] sm:$0x1]
    %vm78 = vcmask 130048
    %v79 = vsel %vm78, %v75, -inf
    %80 = vmax.xlane.f32.xlu0 %v79
    %v81 = vpop.xlane.xlu0 %80
    %v82 = vsub.f32 %v75, %v81
    %v83 = vmul.f32 %v82, 1.442695
    %v84 = vpow.pop %v83
    %v85 = vsel %vm78, %v84, 0.0
    %86 = vadd.xlane.f32.xlu0 %v85
    %v87 = vpop.xlane.xlu0 %86
    %v88 = vlaneseq
    %v89 = vand.u32 %v88, 127
    %90 = vset.pattern.permute.xlu0 0
    %91 = vperm.xlu0 %90, %v76
    %v92 = vpop.permute.xlu0 %91
    %vm93 = vcmp.eq.s32.totalorder %v89, %v92
    %v94 = vsel %vm93, 1, 0
    %v95 = vcvt.s32.f32 %v94
    %v96 = vmul.f32 %v75, %v95
    %v97 = vsel %vm78, %v96, 0.0
    %98 = vadd.xlane.f32.xlu0 %v97
    %v99 = vpop.xlane.xlu0 %98
    %v101 = vperm.slane %v77, 0
    %v103 = vmul.f32 %v101, %v95
    %v104 = vsel %vm78, %v103, 0.0
    %105 = vadd.xlane.f32.xlu0 %v104
    %v106 = vpop.xlane.xlu0 %105
    %v107 = vsub.f32 %v99, %v81
    %v108 = vlog2.pop %v87
    %v109 = vmul.f32 %v108, 0.6931472
    %v110 = vsub.f32 %v107, %v109
    %v111 = vmul.f32 %v110, 1.442695
    %v112 = vpow.pop %v111
    %v113 = vsub.f32 1.0, %v112
    %v114 = vmul.f32 %v113, %v113
    %v115 = vsub.f32 0.0, %v106
    %v116 = vmul.f32 %v115, %v114
    %v117 = vmul.f32 %v116, %v110
    %v118 = vld [vmem:[#allocation2] sm:$0x1]
    %v119 = vrot.slane %v117, 4
    %v120 = vadd.f32 %v117, %v119
    %v121 = vrot.slane %v120, 2
    %v122 = vadd.f32 %v120, %v121
    %v123 = vrot.slane %v122, 1
    %v124 = vadd.f32 %v122, %v123
    %v125 = vadd.f32 %v118, %v124
    %vm126 = vcmask 0
    %127 = vst.msk [vmem:[#allocation2] sm:$0x1] %vm126, %v125
    // Predicated region
    $region18: #{tpu_custom_call.1} parent=1 // pred_check
      %p128 = pneg %p69
    $region19: #{tpu_custom_call.1} parent=1 // pred_check_branch
      %130 = sbr.rel (%p128) target = $region21
    $region20: #{tpu_custom_call.1} parent=1 // pred_region
      %v131 = vld [vmem:[#allocation2] sm:$0x1]
      %v132 = vmul.f32 %v131, 0.125
      %v134 = vperm.slane %v132, 0
      %135 = vset.pattern.permute.xlu0 0
      %136 = vperm.xlu0 %135, %v134
      %v137 = vpop.permute.xlu0 %136
      %139 = vst [vmem:[#allocation3] sm:$0xff] %v137
    $region21: #{tpu_custom_call.1} parent=1 // pred_fallthru
      _
    // Predicated region
    $region22: #{tpu_custom_call.1} parent=1 // pred_check
      _
    $region23: #{tpu_custom_call.1} parent=1 // pred_check_branch
      %141 = sbr.rel (0) target = $region25
    $region24: #{tpu_custom_call.1} parent=1 // pred_region
      %143 = vsyncadd [#allocation4], 0
      %s145 = sshll.u32 [#allocation3], 4
      %s146 = int_to_ptr.vmem [resolvable:$true] %s145
      %s147 = sshll.u32 %s3, 4
      %s148 = int_to_ptr.hbm [resolvable:$true] %s147
      %150 = dma.vmem_to_hbm [thread:$0]  %s146, 128, %s148, [#allocation4]
    $region25: #{tpu_custom_call.1} parent=1 // pred_fallthru
      _
    // Predicated region
    $region26: #{tpu_custom_call.1} parent=1 // pred_check
      _
    $region27: #{tpu_custom_call.1} parent=1 // pred_check_branch
      %152 = sbr.rel (0) target = $region29
    $region28: #{tpu_custom_call.1} parent=1 // pred_region
      %154 = dma.done [#allocation4], 128
    $region29: #{tpu_custom_call.1} parent=1 // pred_fallthru
      _
    %155 = vsyncpa [#allocation4], 1

</llo_original>
